<compile_context>
chip_gen: v7x
topology: tpu7x:2x2x1
jax: 0.10.0
libtpu: 0.0.40
codegen_flags: <defaults>
</compile_context>

<pallas_src>
import functools

import jax
import jax.numpy as jnp
from jax import lax
from jax.experimental import pallas as pl
from jax.experimental.pallas import tpu as pltpu


def _cam_kernel(x_ref, w_ref, b_ref, y_ref, hm_ref, *pool_refs,
                compute_dtype, hw_valid, tile_hw, fuse_pool):
    # x_ref : (Cp, T)  x.dtype   one batch element's spatial tile (channels on sublanes)
    # w_ref : (Cp, Cp) compute   effective 1x1-conv weight (gap/gmp scales folded in)
    # b_ref : (Cp, 1)  f32       bias column
    # y_ref : (Cp, T)  compute   activated conv output tile (bf16 writeback)
    # hm_ref: (1, T)   f32       channel-sum heatmap tile
    # pool_refs (fused only): sum_ref (Cp,1) f32, max_ref (Cp,1) f32 — resident
    #   per-batch accumulators across the HW ("arbitrary") grid axis.
    x = x_ref[...]
    o = jnp.dot(w_ref[...], x.astype(compute_dtype),
                preferred_element_type=jnp.float32)          # MXU, f32 accumulate
    o = jnp.maximum(o + b_ref[...], 0.0)                     # conv1x1 bias + ReLU
    y_ref[...] = o.astype(y_ref.dtype)                       # bf16 writeback
    hm_ref[...] = jnp.sum(o, axis=0, keepdims=True)          # heatmap from f32 result

    if fuse_pool:
        sum_ref, max_ref = pool_refs
        t = pl.program_id(1)
        xf = x.astype(jnp.float32)

        @pl.when(t == 0)
        def _():
            sum_ref[...] = jnp.zeros_like(sum_ref)
            max_ref[...] = jnp.full_like(max_ref, -jnp.inf)

        if hw_valid % tile_hw != 0:
            # Last tile contains zero-padded HW columns: mask them for the max
            # (sum is already correct because pads are zero).
            col = t * tile_hw + lax.broadcasted_iota(jnp.int32, xf.shape, 1)
            xm = jnp.where(col < hw_valid, xf, -jnp.inf)
        else:
            xm = xf
        sum_ref[...] += jnp.sum(xf, axis=1, keepdims=True)
        max_ref[...] = jnp.maximum(max_ref[...],
                                   jnp.max(xm, axis=1, keepdims=True))


def cam_attention(x, gap_w, gmp_w, conv_w, conv_b, *,
                  compute_dtype=jnp.bfloat16, y_dtype=None):
    """x: (B, C, H, W); gap_w/gmp_w: (1, C); conv_w: (C, 2C, 1, 1); conv_b: (C,).

    Returns (y, cam_logit, heatmap). y is emitted in `y_dtype` (default bf16,
    halving the dominant HBM writeback stream); pass y_dtype=jnp.float32 to
    match the PyTorch output dtype exactly at the cost of 2x y traffic.
    """
    B, C, H, W = x.shape
    HW = H * W
    if y_dtype is None:
        y_dtype = compute_dtype

    # ---- fold gap/gmp channel scales into one effective (C, C) conv weight ----
    cw = conv_w.reshape(C, 2 * C).astype(jnp.float32)
    gap_row = gap_w.reshape(1, C).astype(jnp.float32)
    gmp_row = gmp_w.reshape(1, C).astype(jnp.float32)
    w_eff = cw[:, :C] * gap_row + cw[:, C:] * gmp_row

    # ---- tiling: sublane-padded channels, lane-aligned spatial tiles ----------
    Cp = max(8, -(-C // 8) * 8)                       # channel (sublane) padding
    TILE_HW = min(1024, -(-HW // 128) * 128)          # lane tile, multiple of 128
    HW_pad = -(-HW // TILE_HW) * TILE_HW
    n_hw = HW_pad // TILE_HW
    needs_pad = (Cp != C) or (HW_pad != HW)

    x3 = x.reshape(B, C, HW)
    if needs_pad:
        x_in = jnp.zeros((B, Cp, HW_pad), x.dtype).at[:, :C, :HW].set(x3)
    else:
        x_in = x3                                     # stream x as stored, no copy

    w_p = jnp.zeros((Cp, Cp), compute_dtype).at[:C, :C].set(w_eff.astype(compute_dtype))
    b_p = jnp.zeros((Cp, 1), jnp.float32).at[:C, 0].set(
        conv_b.reshape(C).astype(jnp.float32))

    # Fuse global sum/max pooling into the streaming pass; with B == 1 keep both
    # grid axes "parallel" instead so v7x's two TensorCores both get work.
    fuse_pool = B >= 2

    x_isz = jnp.dtype(x.dtype).itemsize
    c_isz = jnp.dtype(compute_dtype).itemsize
    y_isz = jnp.dtype(y_dtype).itemsize

    # VMEM budget: double-buffered x/y/hm tiles + resident weights/bias + pool accs.
    tile_bytes = (2 * (Cp * TILE_HW * x_isz + Cp * TILE_HW * y_isz + TILE_HW * 4)
                  + Cp * Cp * c_isz + Cp * 4 + 4 * Cp * 4)
    vmem_limit = int(min(64 * 1024 * 1024, max(4 * 1024 * 1024, 4 * tile_bytes)))

    cost = pl.CostEstimate(
        flops=2 * B * Cp * Cp * HW_pad,
        transcendentals=0,
        bytes_accessed=(B * Cp * HW_pad * x_isz            # x read (single pass)
                        + Cp * Cp * c_isz + Cp * 4          # weights + bias
                        + B * Cp * HW_pad * y_isz           # y writeback
                        + B * HW_pad * 4                    # heatmap
                        + (2 * B * Cp * 4 if fuse_pool else 0)))

    out_shape = [jax.ShapeDtypeStruct((B, Cp, HW_pad), y_dtype),
                 jax.ShapeDtypeStruct((B, 1, HW_pad), jnp.float32)]
    out_specs = [pl.BlockSpec((None, Cp, TILE_HW), lambda b, t: (b, 0, t)),
                 pl.BlockSpec((None, 1, TILE_HW), lambda b, t: (b, 0, t))]
    if fuse_pool:
        out_shape += [jax.ShapeDtypeStruct((B, Cp, 1), jnp.float32),   # running sum
                      jax.ShapeDtypeStruct((B, Cp, 1), jnp.float32)]   # running max
        out_specs += [pl.BlockSpec((None, Cp, 1), lambda b, t: (b, 0, 0)),
                      pl.BlockSpec((None, Cp, 1), lambda b, t: (b, 0, 0))]
        dims = ("parallel", "arbitrary")
    else:
        dims = ("parallel", "parallel")

    kernel = functools.partial(_cam_kernel, compute_dtype=compute_dtype,
                               hw_valid=HW, tile_hw=TILE_HW, fuse_pool=fuse_pool)

    outs = pl.pallas_call(
        kernel,
        out_shape=tuple(out_shape),
        grid=(B, n_hw),
        in_specs=[
            pl.BlockSpec((None, Cp, TILE_HW), lambda b, t: (b, 0, t)),  # x tile
            pl.BlockSpec((Cp, Cp), lambda b, t: (0, 0)),                # W_eff (resident)
            pl.BlockSpec((Cp, 1), lambda b, t: (0, 0)),                 # bias (resident)
        ],
        out_specs=tuple(out_specs),
        compiler_params=pltpu.CompilerParams(
            dimension_semantics=dims,
            vmem_limit_bytes=vmem_limit),
        cost_estimate=cost,
    )(x_in, w_p, b_p)

    # ---- cam_logit: tiny (B, C) @ (C, 1) heads, plain JAX ----------------------
    if fuse_pool:
        y_p, hm_p, xsum, xmax = outs
        avg = xsum[:, :C, 0] / float(HW)              # divide by HW, not HW_pad
        mx = xmax[:, :C, 0]
    else:
        y_p, hm_p = outs
        xf = x3.astype(jnp.float32)
        avg = jnp.mean(xf, axis=2)
        mx = jnp.max(xf, axis=2)
    gap_logit = avg @ gap_row.T                       # (B, 1)
    gmp_logit = mx @ gmp_row.T                        # (B, 1)
    cam_logit = jnp.concatenate([gap_logit, gmp_logit], axis=1)

    if needs_pad:
        y = y_p[:, :C, :HW].reshape(B, C, H, W)
        heatmap = hm_p[:, :, :HW].reshape(B, 1, H, W)
    else:
        y = y_p.reshape(B, C, H, W)
        heatmap = hm_p.reshape(B, 1, H, W)
    return y, cam_logit, heatmap


def cam_attention_reference(x, gap_w, gmp_w, conv_w, conv_b):
    """Plain-JAX f32 reference mirroring the PyTorch forward."""
    B, C, H, W = x.shape
    xf = x.reshape(B, C, H * W)
    avg = xf.mean(axis=2)                             # adaptive_avg_pool2d(x, 1)
    mx = xf.max(axis=2)                               # adaptive_max_pool2d(x, 1)
    gap_logit = avg @ gap_w.T                         # (B, 1)
    gmp_logit = mx @ gmp_w.T                          # (B, 1)
    cam_logit = jnp.concatenate([gap_logit, gmp_logit], axis=1)
    gap = x * gap_w.reshape(1, C, 1, 1)
    gmp = x * gmp_w.reshape(1, C, 1, 1)
    cat = jnp.concatenate([gap, gmp], axis=1)         # (B, 2C, H, W)
    cwm = conv_w.reshape(C, 2 * C)
    out = jnp.einsum('oc,bchw->bohw', cwm, cat) + conv_b.reshape(1, C, 1, 1)
    out = jnp.maximum(out, 0.0)
    heatmap = out.sum(axis=1, keepdims=True)
    return out, cam_logit, heatmap


if __name__ == "__main__":
    B, C, H, W = 2, 4, 16, 16
    key = jax.random.PRNGKey(0)
    kx, kg, km, kw, kb = jax.random.split(key, 5)

    x = jax.random.normal(kx, (B, C, H, W), dtype=jnp.float32)
    # Deterministic synthetic parameters (shapes from the PyTorch module __init__).
    gap_w = 0.5 * jax.random.normal(kg, (1, C), dtype=jnp.float32)             # gap_fc.weight
    gmp_w = 0.5 * jax.random.normal(km, (1, C), dtype=jnp.float32)             # gmp_fc.weight
    conv_w = 0.3 * jax.random.normal(kw, (C, 2 * C, 1, 1), dtype=jnp.float32)  # conv1x1.weight
    conv_b = 0.1 * jax.random.normal(kb, (C,), dtype=jnp.float32)              # conv1x1.bias

    y, cam_logit, heatmap = cam_attention(x, gap_w, gmp_w, conv_w, conv_b)
    jax.block_until_ready((y, cam_logit, heatmap))

    y_r, cam_r, hm_r = cam_attention_reference(x, gap_w, gmp_w, conv_w, conv_b)
    assert y.shape == (B, C, H, W) and cam_logit.shape == (B, 2) and heatmap.shape == (B, 1, H, W)
    # bf16 MXU operands + bf16 y writeback -> loosened tolerances vs f32 reference.
    assert jnp.allclose(y.astype(jnp.float32), y_r, atol=5e-2, rtol=5e-2)
    assert jnp.allclose(cam_logit, cam_r, atol=5e-3, rtol=5e-3)
    assert jnp.allclose(heatmap, hm_r, atol=5e-2, rtol=5e-2)

    print("KERNEL_OK")
</pallas_src>

<mosaic_0001>
module attributes {stable_mosaic.version = 11 : i64} {
  func.func @_cam_kernel(%arg0: i32, %arg1: i32, %arg2: memref<1x8x256xf32, #tpu.memory_space<vmem>>, %arg3: memref<8x8xbf16, #tpu.memory_space<vmem>>, %arg4: memref<8x1xf32, #tpu.memory_space<vmem>>, %arg5: memref<1x8x256xbf16, #tpu.memory_space<vmem>>, %arg6: memref<1x1x256xf32, #tpu.memory_space<vmem>>, %arg7: memref<1x8x1xf32, #tpu.memory_space<vmem>>, %arg8: memref<1x8x1xf32, #tpu.memory_space<vmem>>) attributes {dimension_semantics = [#tpu.dimension_semantics<parallel>, #tpu.dimension_semantics<arbitrary>], iteration_bounds = array<i64: 2, 1>, scalar_prefetch = 0 : i64, scratch_operands = 0 : i64, tpu.core_type = #tpu.core_type<tc>, window_params = [{transform_indices = @transform_0, window_bounds = array<i64: 1, 8, 256>}, {pipeline_mode = #tpu.pipeline_mode<synchronous>, transform_indices = @transform_1, window_bounds = array<i64: 8, 8>}, {pipeline_mode = #tpu.pipeline_mode<synchronous>, transform_indices = @transform_2, window_bounds = array<i64: 8, 1>}, {transform_indices = @transform_3, window_bounds = array<i64: 1, 8, 256>}, {transform_indices = @transform_4, window_bounds = array<i64: 1, 1, 256>}, {transform_indices = @transform_5, window_bounds = array<i64: 1, 8, 1>}, {transform_indices = @transform_6, window_bounds = array<i64: 1, 8, 1>}]} {
    %c0 = arith.constant 0 : index
    %c0_0 = arith.constant 0 : index
    %c0_1 = arith.constant 0 : index
    %0 = vector.load %arg2[%c0, %c0_0, %c0_1] : memref<1x8x256xf32, #tpu.memory_space<vmem>>, vector<1x8x256xf32>
    %1 = vector.shape_cast %0 : vector<1x8x256xf32> to vector<8x256xf32>
    %c0_2 = arith.constant 0 : index
    %c0_3 = arith.constant 0 : index
    %2 = vector.load %arg3[%c0_2, %c0_3] : memref<8x8xbf16, #tpu.memory_space<vmem>>, vector<8x8xbf16>
    %3 = arith.truncf %1 : vector<8x256xf32> to vector<8x256xbf16>
    %cst = arith.constant dense<0.000000e+00> : vector<8x256xf32>
    %4 = tpu.matmul %2, %3, %cst {dimension_numbers = #tpu.dot_dimension_numbers<[1], [0], [0], [1], [0, 0, 1, 1], [], []>} : vector<8x8xbf16>, vector<8x256xbf16>, vector<8x256xf32> -> vector<8x256xf32>
    %c0_4 = arith.constant 0 : index
    %c0_5 = arith.constant 0 : index
    %5 = vector.load %arg4[%c0_4, %c0_5] : memref<8x1xf32, #tpu.memory_space<vmem>>, vector<8x1xf32>
    %6 = vector.broadcast %5 : vector<8x1xf32> to vector<8x256xf32>
    %7 = arith.addf %4, %6 : vector<8x256xf32>
    %cst_6 = arith.constant 0.000000e+00 : f32
    %8 = vector.broadcast %cst_6 : f32 to vector<8x256xf32>
    %9 = arith.maximumf %7, %8 : vector<8x256xf32>
    %10 = arith.truncf %9 : vector<8x256xf32> to vector<8x256xbf16>
    %c0_7 = arith.constant 0 : index
    %c0_8 = arith.constant 0 : index
    %c0_9 = arith.constant 0 : index
    %11 = vector.load %arg5[%c0_7, %c0_8, %c0_9] : memref<1x8x256xbf16, #tpu.memory_space<vmem>>, vector<1x8x256xbf16>
    %12 = vector.shape_cast %11 : vector<1x8x256xbf16> to vector<8x256xbf16>
    %13 = vector.shape_cast %10 : vector<8x256xbf16> to vector<1x8x256xbf16>
    tpu.vector_store %arg5[%c0_7, %c0_8, %c0_9], %13 {strides = array<i32>} : memref<1x8x256xbf16, #tpu.memory_space<vmem>>, vector<1x8x256xbf16>,
    %cst_10 = arith.constant dense<0.000000e+00> : vector<256xf32>
    %14 = vector.multi_reduction <add>, %9, %cst_10 [0] : vector<8x256xf32> to vector<256xf32>
    %15 = vector.shape_cast %14 : vector<256xf32> to vector<1x256xf32>
    %c0_11 = arith.constant 0 : index
    %c0_12 = arith.constant 0 : index
    %c0_13 = arith.constant 0 : index
    %16 = vector.load %arg6[%c0_11, %c0_12, %c0_13] : memref<1x1x256xf32, #tpu.memory_space<vmem>>, vector<1x1x256xf32>
    %17 = vector.shape_cast %16 : vector<1x1x256xf32> to vector<1x256xf32>
    %18 = vector.shape_cast %15 : vector<1x256xf32> to vector<1x1x256xf32>
    tpu.vector_store %arg6[%c0_11, %c0_12, %c0_13], %18 {strides = array<i32>} : memref<1x1x256xf32, #tpu.memory_space<vmem>>, vector<1x1x256xf32>,
    %c0_i32 = arith.constant 0 : i32
    %19 = arith.cmpi eq, %arg1, %c0_i32 : i32
    %20 = arith.extui %19 : i1 to i32
    %c0_i32_14 = arith.constant 0 : i32
    %21 = arith.cmpi ne, %20, %c0_i32_14 : i32
    scf.if %21 {
      %cst_29 = arith.constant 0.000000e+00 : f32
      %38 = vector.broadcast %cst_29 : f32 to vector<8x1xf32>
      %c0_30 = arith.constant 0 : index
      %c0_31 = arith.constant 0 : index
      %c0_32 = arith.constant 0 : index
      %39 = vector.load %arg7[%c0_30, %c0_31, %c0_32] : memref<1x8x1xf32, #tpu.memory_space<vmem>>, vector<1x8x1xf32>
      %40 = vector.shape_cast %39 : vector<1x8x1xf32> to vector<8x1xf32>
      %41 = vector.shape_cast %38 : vector<8x1xf32> to vector<1x8x1xf32>
      tpu.vector_store %arg7[%c0_30, %c0_31, %c0_32], %41 {strides = array<i32>} : memref<1x8x1xf32, #tpu.memory_space<vmem>>, vector<1x8x1xf32>,
      %cst_33 = arith.constant 0xFF800000 : f32
      %42 = vector.broadcast %cst_33 : f32 to vector<8x1xf32>
      %c0_34 = arith.constant 0 : index
      %c0_35 = arith.constant 0 : index
      %c0_36 = arith.constant 0 : index
      %43 = vector.load %arg8[%c0_34, %c0_35, %c0_36] : memref<1x8x1xf32, #tpu.memory_space<vmem>>, vector<1x8x1xf32>
      %44 = vector.shape_cast %43 : vector<1x8x1xf32> to vector<8x1xf32>
      %45 = vector.shape_cast %42 : vector<8x1xf32> to vector<1x8x1xf32>
      tpu.vector_store %arg8[%c0_34, %c0_35, %c0_36], %45 {strides = array<i32>} : memref<1x8x1xf32, #tpu.memory_space<vmem>>, vector<1x8x1xf32>,
    } else {
    }
    %c0_15 = arith.constant 0 : index
    %c0_16 = arith.constant 0 : index
    %c0_17 = arith.constant 0 : index
    %22 = vector.load %arg7[%c0_15, %c0_16, %c0_17] : memref<1x8x1xf32, #tpu.memory_space<vmem>>, vector<1x8x1xf32>
    %23 = vector.shape_cast %22 : vector<1x8x1xf32> to vector<8x1xf32>
    %cst_18 = arith.constant dense<0.000000e+00> : vector<8xf32>
    %24 = vector.multi_reduction <add>, %1, %cst_18 [1] : vector<8x256xf32> to vector<8xf32>
    %25 = vector.shape_cast %24 : vector<8xf32> to vector<8x1xf32>
    %26 = arith.addf %23, %25 : vector<8x1xf32>
    %c0_19 = arith.constant 0 : index
    %c0_20 = arith.constant 0 : index
    %c0_21 = arith.constant 0 : index
    %27 = vector.load %arg7[%c0_19, %c0_20, %c0_21] : memref<1x8x1xf32, #tpu.memory_space<vmem>>, vector<1x8x1xf32>
    %28 = vector.shape_cast %27 : vector<1x8x1xf32> to vector<8x1xf32>
    %29 = vector.shape_cast %26 : vector<8x1xf32> to vector<1x8x1xf32>
    tpu.vector_store %arg7[%c0_19, %c0_20, %c0_21], %29 {strides = array<i32>} : memref<1x8x1xf32, #tpu.memory_space<vmem>>, vector<1x8x1xf32>,
    %c0_22 = arith.constant 0 : index
    %c0_23 = arith.constant 0 : index
    %c0_24 = arith.constant 0 : index
    %30 = vector.load %arg8[%c0_22, %c0_23, %c0_24] : memref<1x8x1xf32, #tpu.memory_space<vmem>>, vector<1x8x1xf32>
    %31 = vector.shape_cast %30 : vector<1x8x1xf32> to vector<8x1xf32>
    %cst_25 = arith.constant dense<0xFF800000> : vector<8xf32>
    %32 = vector.multi_reduction <maximumf>, %1, %cst_25 [1] : vector<8x256xf32> to vector<8xf32>
    %33 = vector.shape_cast %32 : vector<8xf32> to vector<8x1xf32>
    %34 = arith.maximumf %31, %33 : vector<8x1xf32>
    %c0_26 = arith.constant 0 : index
    %c0_27 = arith.constant 0 : index
    %c0_28 = arith.constant 0 : index
    %35 = vector.load %arg8[%c0_26, %c0_27, %c0_28] : memref<1x8x1xf32, #tpu.memory_space<vmem>>, vector<1x8x1xf32>
    %36 = vector.shape_cast %35 : vector<1x8x1xf32> to vector<8x1xf32>
    %37 = vector.shape_cast %34 : vector<8x1xf32> to vector<1x8x1xf32>
    tpu.vector_store %arg8[%c0_26, %c0_27, %c0_28], %37 {strides = array<i32>} : memref<1x8x1xf32, #tpu.memory_space<vmem>>, vector<1x8x1xf32>,
    return
  }
  func.func @transform_0(%arg0: i32, %arg1: i32) -> (i32, i32, i32) {
    %c0_i32 = arith.constant 0 : i32
    %c0_i32_0 = arith.constant 0 : i32
    return %arg0, %c0_i32, %arg1 : i32, i32, i32
  }
  func.func @transform_1(%arg0: i32, %arg1: i32) -> (i32, i32) {
    %c0_i32 = arith.constant 0 : i32
    %c0_i32_0 = arith.constant 0 : i32
    %c0_i32_1 = arith.constant 0 : i32
    return %c0_i32, %c0_i32_0 : i32, i32
  }
  func.func @transform_2(%arg0: i32, %arg1: i32) -> (i32, i32) {
    %c0_i32 = arith.constant 0 : i32
    %c0_i32_0 = arith.constant 0 : i32
    %c0_i32_1 = arith.constant 0 : i32
    return %c0_i32, %c0_i32_0 : i32, i32
  }
  func.func @transform_3(%arg0: i32, %arg1: i32) -> (i32, i32, i32) {
    %c0_i32 = arith.constant 0 : i32
    %c0_i32_0 = arith.constant 0 : i32
    return %arg0, %c0_i32, %arg1 : i32, i32, i32
  }
  func.func @transform_4(%arg0: i32, %arg1: i32) -> (i32, i32, i32) {
    %c0_i32 = arith.constant 0 : i32
    %c0_i32_0 = arith.constant 0 : i32
    return %arg0, %c0_i32, %arg1 : i32, i32, i32
  }
  func.func @transform_5(%arg0: i32, %arg1: i32) -> (i32, i32, i32) {
    %c0_i32 = arith.constant 0 : i32
    %c0_i32_0 = arith.constant 0 : i32
    %c0_i32_1 = arith.constant 0 : i32
    return %arg0, %c0_i32, %c0_i32_0 : i32, i32, i32
  }
  func.func @transform_6(%arg0: i32, %arg1: i32) -> (i32, i32, i32) {
    %c0_i32 = arith.constant 0 : i32
    %c0_i32_0 = arith.constant 0 : i32
    %c0_i32_1 = arith.constant 0 : i32
    return %arg0, %c0_i32, %c0_i32_0 : i32, i32, i32
  }
}

</mosaic_0001>

<llo_original>
// kernel: tpu_custom_call.1
$region0: #{tpu_custom_call.1}
  #allocation0 [shape = 'u32[]', space=smem, size = 0x4, offset = 0x4, fixed_abs, tag = 'smem constant byte address 0x4 - core index']
  #allocation1 [shape = 'u32[144,128]{1,0:T(1,128)}', space=vmem, size = 0x12000, scoped, tag = 'internal scratch']
  %s0 = inlined_call_operand.hbm [shape: f32[2,8,256], index: 0, kind: input, shape index: {}]
  %s1 = inlined_call_operand.vmem [shape: bf16[8,8], index: 1, kind: input, shape index: {}]
  %s2 = inlined_call_operand.vmem [shape: f32[8,1], index: 2, kind: input, shape index: {}]
  %s3 = inlined_call_operand.hbm [shape: bf16[2,8,256], index: 3, kind: output, shape index: {0}]
  %s4 = inlined_call_operand.hbm [shape: f32[2,1,256], index: 4, kind: output, shape index: {1}]
  %s5 = inlined_call_operand.vmem [shape: f32[2,8,1], index: 5, kind: output, shape index: {2}]
  %s6 = inlined_call_operand.vmem [shape: f32[2,8,1], index: 6, kind: output, shape index: {3}]
  %7 = xla_tuple %s3, %s4, %s5, %s6
  %s8 = sld [smem:[#allocation0]]
  $region77: #{tpu_custom_call.1} parent=0
    _
  %s10 = ssub.s32 1, %s8
  %s11 = scalar_select 0, %s10, %s8
  $region1: #{tpu_custom_call.1} parent=0
    #allocation2 [shape = 'u8[16384]{0}', space=vmem, size = 0x4000, scoped, tag = 'input window, operand 0']
    #allocation3 [shape = 's32[2]{0}', space=sflag, size = 0x8, scoped, tag = 'scoped memory for tpu_custom_call.1']
    #allocation4 [shape = 's32[2]{0}', space=sflag, size = 0x8, scoped, tag = 'scoped memory for tpu_custom_call.1']
    #allocation5 [shape = 'u8[8192]{0}', space=vmem, size = 0x2000, scoped, tag = 'output window, operand 0']
    #allocation6 [shape = 'u8[2048]{0}', space=vmem, size = 0x800, scoped, tag = 'output window, operand 1']
    #allocation7 [shape = 's32[2]{0}', space=sflag, size = 0x8, scoped, tag = 'scoped memory for tpu_custom_call.1']
    %12 = vsyncpa [#allocation3], 0
    %s13 = scalar_lea.sflag [#allocation3], 1
    %14 = vsyncpa %s13, 0
    %15 = vsyncpa [#allocation4], 0
    %s16 = scalar_lea.sflag [#allocation4], 1
    %17 = vsyncpa %s16, 0
    %18 = vsyncpa [#allocation7], 0
    %s19 = scalar_lea.sflag [#allocation7], 1
    %20 = vsyncpa %s19, 0
    loop: start=0, step=1, limit=4
    $region2: #{tpu_custom_call.1} parent=1 // loop_pre_header
      _
    $region3: #{tpu_custom_call.1} parent=1 // loop_header
      %s22 = sphi 0, %s26
      %p23 = scmp.ge.s32.totalorder %s22, 4
      %s29 = sphi 0, %s41
      %s30 = sphi 0, %s37
      %s31 = sphi 0, %s29
      %s32 = sphi 0, %s30
      %s33 = sphi 0, %s31
      %s34 = sphi 0, %s32
      %s46 = sphi 0, %s48
      %s49 = sphi 0, %s46
      %s50 = sphi 0, %s49
      %s66 = sphi 0, %s50
      %s70 = sphi 0, %s70
      %s72 = sphi 0, %s70
      %s73 = sphi 0, %s72
      %s87 = sphi 0, %s73
      %s91 = sphi 0, %s91
      %s93 = sphi 0, %s91
      %s94 = sphi 0, %s93
      %s108 = sphi 0, %s94
      %s116 = sphi 0, %s118
      %s119 = sphi 0, %s116
      %s120 = sphi 0, %s119
      %s136 = sphi 0, %s120
      %s144 = sphi 0, %s146
      %s147 = sphi 0, %s144
      %s148 = sphi 0, %s147
      %s164 = sphi 0, %s148
      %s170 = sphi 0, %s172
      %s173 = sphi 0, %s170
      %s174 = sphi 0, %s173
      %s190 = sphi 0, %s174
      %s196 = sphi 0, %s198
      %s199 = sphi 0, %s196
      %s200 = sphi 0, %s199
      %s216 = sphi 0, %s200
    $region4: #{tpu_custom_call.1} parent=1 // loop_header_branch
      %25 = sbr.rel (%p23) target = $region8
    $region5: #{tpu_custom_call.1} parent=1 // loop_body
      %s27 = ssub.s32 %s22, 1
      %s28 = ssub.s32 %s22, 2
      %s35 = sadd.s32 1, %s30
      %p36 = scmp.ge.s32.totalorder %s35, 1
      %s37 = scalar_select %p36, 0, %s35
      %s38 = sadd.s32 1, %s29
      %s39 = scalar_select %p36, %s38, %s29
      %p40 = scmp.ge.s32.totalorder %s39, 2
      %s41 = scalar_select %p40, 0, %s39
      %s42 = ssub.s32 %s29, %s41
      %s43 = ssub.s32 %s30, %s37
      %s44 = sor.u32 %s42, %s43
      %p45 = scmp.eq.s32.totalorder %s44, 0
      %s47 = sadd.s32 %s46, 1
      %s48 = scalar_select %p45, %s46, %s47
      %p51 = pneg %p45
      %p52 = scmp.eq.s32.totalorder %s22, 1
      %p53 = por %p51, %p52
      %p54 = scmp.ne.s32.totalorder %s46, %s49
      %p55 = scmp.eq.s32.totalorder %s22, 0
      %p56 = por %p54, %p55
      %p57 = scmp.ne.s32.totalorder %s46, %s49
      %p58 = scmp.eq.s32.totalorder %s27, 1
      %p59 = por %p57, %p58
      %p60 = scmp.ne.s32.totalorder %s49, %s50
      %p61 = scmp.eq.s32.totalorder %s27, 0
      %p62 = por %p60, %p61
      %p63 = scmp.ne.s32.totalorder %s49, %s50
      %p64 = scmp.eq.s32.totalorder %s28, 1
      %p65 = por %p63, %p64
      %p67 = scmp.ne.s32.totalorder %s50, %s66
      %p68 = scmp.eq.s32.totalorder %s28, 0
      %p69 = por %p67, %p68
      %s71 = sadd.s32 %s70, 1
      %p74 = scmp.eq.s32.totalorder %s22, 1
      %p75 = scmp.ne.s32.totalorder %s70, %s72
      %p76 = scmp.eq.s32.totalorder %s22, 0
      %p77 = por %p75, %p76
      %p78 = scmp.ne.s32.totalorder %s70, %s72
      %p79 = scmp.eq.s32.totalorder %s27, 1
      %p80 = por %p78, %p79
      %p81 = scmp.ne.s32.totalorder %s72, %s73
      %p82 = scmp.eq.s32.totalorder %s27, 0
      %p83 = por %p81, %p82
      %p84 = scmp.ne.s32.totalorder %s72, %s73
      %p85 = scmp.eq.s32.totalorder %s28, 1
      %p86 = por %p84, %p85
      %p88 = scmp.ne.s32.totalorder %s73, %s87
      %p89 = scmp.eq.s32.totalorder %s28, 0
      %p90 = por %p88, %p89
      %s92 = sadd.s32 %s91, 1
      %p95 = scmp.eq.s32.totalorder %s22, 1
      %p96 = scmp.ne.s32.totalorder %s91, %s93
      %p97 = scmp.eq.s32.totalorder %s22, 0
      %p98 = por %p96, %p97
      %p99 = scmp.ne.s32.totalorder %s91, %s93
      %p100 = scmp.eq.s32.totalorder %s27, 1
      %p101 = por %p99, %p100
      %p102 = scmp.ne.s32.totalorder %s93, %s94
      %p103 = scmp.eq.s32.totalorder %s27, 0
      %p104 = por %p102, %p103
      %p105 = scmp.ne.s32.totalorder %s93, %s94
      %p106 = scmp.eq.s32.totalorder %s28, 1
      %p107 = por %p105, %p106
      %p109 = scmp.ne.s32.totalorder %s94, %s108
      %p110 = scmp.eq.s32.totalorder %s28, 0
      %p111 = por %p109, %p110
      %s112 = ssub.s32 %s29, %s41
      %s113 = ssub.s32 %s30, %s37
      %s114 = sor.u32 %s112, %s113
      %p115 = scmp.eq.s32.totalorder %s114, 0
      %s117 = sadd.s32 %s116, 1
      %s118 = scalar_select %p115, %s116, %s117
      %p121 = pneg %p115
      %p122 = scmp.eq.s32.totalorder %s22, 1
      %p123 = por %p121, %p122
      %p124 = scmp.ne.s32.totalorder %s116, %s119
      %p125 = scmp.eq.s32.totalorder %s22, 0
      %p126 = por %p124, %p125
      %p127 = scmp.ne.s32.totalorder %s116, %s119
      %p128 = scmp.eq.s32.totalorder %s27, 1
      %p129 = por %p127, %p128
      %p130 = scmp.ne.s32.totalorder %s119, %s120
      %p131 = scmp.eq.s32.totalorder %s27, 0
      %p132 = por %p130, %p131
      %p133 = scmp.ne.s32.totalorder %s119, %s120
      %p134 = scmp.eq.s32.totalorder %s28, 1
      %p135 = por %p133, %p134
      %p137 = scmp.ne.s32.totalorder %s120, %s136
      %p138 = scmp.eq.s32.totalorder %s28, 0
      %p139 = por %p137, %p138
      %s140 = ssub.s32 %s29, %s41
      %s141 = ssub.s32 %s30, %s37
      %s142 = sor.u32 %s140, %s141
      %p143 = scmp.eq.s32.totalorder %s142, 0
      %s145 = sadd.s32 %s144, 1
      %s146 = scalar_select %p143, %s144, %s145
      %p149 = pneg %p143
      %p150 = scmp.eq.s32.totalorder %s22, 1
      %p151 = por %p149, %p150
      %p152 = scmp.ne.s32.totalorder %s144, %s147
      %p153 = scmp.eq.s32.totalorder %s22, 0
      %p154 = por %p152, %p153
      %p155 = scmp.ne.s32.totalorder %s144, %s147
      %p156 = scmp.eq.s32.totalorder %s27, 1
      %p157 = por %p155, %p156
      %p158 = scmp.ne.s32.totalorder %s147, %s148
      %p159 = scmp.eq.s32.totalorder %s27, 0
      %p160 = por %p158, %p159
      %p161 = scmp.ne.s32.totalorder %s147, %s148
      %p162 = scmp.eq.s32.totalorder %s28, 1
      %p163 = por %p161, %p162
      %p165 = scmp.ne.s32.totalorder %s148, %s164
      %p166 = scmp.eq.s32.totalorder %s28, 0
      %p167 = por %p165, %p166
      %s168 = ssub.s32 %s29, %s41
      %p169 = scmp.eq.s32.totalorder %s168, 0
      %s171 = sadd.s32 %s170, 1
      %s172 = scalar_select %p169, %s170, %s171
      %p175 = pneg %p169
      %p176 = scmp.eq.s32.totalorder %s22, 1
      %p177 = por %p175, %p176
      %p178 = scmp.ne.s32.totalorder %s170, %s173
      %p179 = scmp.eq.s32.totalorder %s22, 0
      %p180 = por %p178, %p179
      %p181 = scmp.ne.s32.totalorder %s170, %s173
      %p182 = scmp.eq.s32.totalorder %s27, 1
      %p183 = por %p181, %p182
      %p184 = scmp.ne.s32.totalorder %s173, %s174
      %p185 = scmp.eq.s32.totalorder %s27, 0
      %p186 = por %p184, %p185
      %p187 = scmp.ne.s32.totalorder %s173, %s174
      %p188 = scmp.eq.s32.totalorder %s28, 1
      %p189 = por %p187, %p188
      %p191 = scmp.ne.s32.totalorder %s174, %s190
      %p192 = scmp.eq.s32.totalorder %s28, 0
      %p193 = por %p191, %p192
      %s194 = ssub.s32 %s29, %s41
      %p195 = scmp.eq.s32.totalorder %s194, 0
      %s197 = sadd.s32 %s196, 1
      %s198 = scalar_select %p195, %s196, %s197
      %p201 = pneg %p195
      %p202 = scmp.eq.s32.totalorder %s22, 1
      %p203 = por %p201, %p202
      %p204 = scmp.ne.s32.totalorder %s196, %s199
      %p205 = scmp.eq.s32.totalorder %s22, 0
      %p206 = por %p204, %p205
      %p207 = scmp.ne.s32.totalorder %s196, %s199
      %p208 = scmp.eq.s32.totalorder %s27, 1
      %p209 = por %p207, %p208
      %p210 = scmp.ne.s32.totalorder %s199, %s200
      %p211 = scmp.eq.s32.totalorder %s27, 0
      %p212 = por %p210, %p211
      %p213 = scmp.ne.s32.totalorder %s199, %s200
      %p214 = scmp.eq.s32.totalorder %s28, 1
      %p215 = por %p213, %p214
      %p217 = scmp.ne.s32.totalorder %s200, %s216
      %p218 = scmp.eq.s32.totalorder %s28, 0
      %p219 = por %p217, %p218
      %p220 = scmp.le.s32.totalorder 1, %s22
      %p221 = scmp.lt.s32.totalorder %s22, 3
      %p222 = pnand %p220, %p221
      %p223 = pneg %p222
      // Predicated region
      $region9: #{tpu_custom_call.1} parent=5 // pred_check
        _
      $region10: #{tpu_custom_call.1} parent=5 // pred_check_branch
        %225 = sbr.rel (%p222) target = $region12
      $region11: #{tpu_custom_call.1} parent=5 // pred_region
        %s226 = ssub.s32 %s22, 1
        // Predicated region
        $region13: #{tpu_custom_call.1} parent=11 // pred_check
          %p227 = pneg %p83
        $region14: #{tpu_custom_call.1} parent=11 // pred_check_branch
          %229 = sbr.rel (%p227) target = $region16
        $region15: #{tpu_custom_call.1} parent=11 // pred_region
          _
        $region16: #{tpu_custom_call.1} parent=11 // pred_fallthru
          _
        // Predicated region
        $region17: #{tpu_custom_call.1} parent=11 // pred_check
          %p230 = pneg %p104
        $region18: #{tpu_custom_call.1} parent=11 // pred_check_branch
          %232 = sbr.rel (%p230) target = $region20
        $region19: #{tpu_custom_call.1} parent=11 // pred_region
          _
        $region20: #{tpu_custom_call.1} parent=11 // pred_fallthru
          _
      $region12: #{tpu_custom_call.1} parent=5 // pred_fallthru
        _
      %p233 = scmp.lt.s32.totalorder %s22, 2
      // Predicated region
      $region21: #{tpu_custom_call.1} parent=5 // pred_check
        %p234 = pneg %p233
      $region22: #{tpu_custom_call.1} parent=5 // pred_check_branch
        %236 = sbr.rel (%p234) target = $region24
      $region23: #{tpu_custom_call.1} parent=5 // pred_region
        // Predicated region
        $region25: #{tpu_custom_call.1} parent=23 // pred_check
          %p237 = pneg %p56
        $region26: #{tpu_custom_call.1} parent=23 // pred_check_branch
          %239 = sbr.rel (%p237) target = $region28
        $region27: #{tpu_custom_call.1} parent=23 // pred_region
          %s240 = sand.u32 %s46, 1
          %s241 = scalar_lea.sflag [#allocation3], %s240
          %s242 = sand.u32 %s46, 1
          %s243 = smul.addr %s242, 16
          %s244 = scalar_lea.vmem [#allocation2], %s243
          %s245 = smul.u32 2, %s30
          %s247 = ssub.s32 256, 256
          %248 = vsyncadd %s241, %s247
          %s249 = smul.addr %s29, 2
          %s250 = sadd.s32 %s245, %s249
          %s251 = smul.addr %s250, 128
          %s252 = scalar_lea.hbm %s0, %s251
          %s254 = sshll.u32 %s244, 4
          %s255 = int_to_ptr.vmem [resolvable:$true] %s254
          %257 = dma.hbm_to_vmem [thread:$0]  %s252, 256, %s255, %s241
        $region28: #{tpu_custom_call.1} parent=23 // pred_fallthru
          _
      $region24: #{tpu_custom_call.1} parent=5 // pred_fallthru
        _
      %p258 = scmp.le.s32.totalorder 1, %s22
      %p259 = scmp.lt.s32.totalorder %s22, 3
      %p260 = pnand %p258, %p259
      %p261 = pneg %p260
      // Predicated region
      $region29: #{tpu_custom_call.1} parent=5 // pred_check
        _
      $region30: #{tpu_custom_call.1} parent=5 // pred_check_branch
        %263 = sbr.rel (%p260) target = $region32
      $region31: #{tpu_custom_call.1} parent=5 // pred_region
        %s264 = ssub.s32 %s22, 1
        %s265 = sand.u32 %s49, 1
        %s266 = scalar_lea.sflag [#allocation3], %s265
        %s267 = sand.u32 %s49, 1
        %s268 = smul.addr %s267, 16
        %s269 = scalar_lea.vmem [#allocation2], %s268
        // Predicated region
        $region33: #{tpu_custom_call.1} parent=31 // pred_check
          %p270 = pneg %p62
        $region34: #{tpu_custom_call.1} parent=31 // pred_check_branch
          %272 = sbr.rel (%p270) target = $region36
        $region35: #{tpu_custom_call.1} parent=31 // pred_region
          %273 = dma.done %s266, 256
        $region36: #{tpu_custom_call.1} parent=31 // pred_fallthru
          _
        %s274 = sand.u32 %s49, 1
        %s275 = scalar_lea.sflag [#allocation3], %s274
        %s276 = sand.u32 %s49, 1
        %s277 = smul.addr %s276, 16
        %s278 = scalar_lea.vmem [#allocation2], %s277
        %p279 = pneg %p62
        %p280 = pneg %p59
        %p281 = pneg %p83
        %p282 = pneg %p80
        %p283 = pneg %p104
        %p284 = pneg %p101
        %p285 = pneg %p132
        %p286 = pneg %p129
        %s287 = sand.u32 %s119, 1
        %s288 = scalar_lea.sflag [#allocation4], %s287
        %s289 = sand.u32 %s119, 1
        %s290 = smul.addr %s289, 8
        %s291 = scalar_lea.vmem [#allocation5], %s290
        %p292 = pneg %p160
        %p293 = pneg %p157
        %s294 = sand.u32 %s147, 1
        %s295 = scalar_lea.sflag [#allocation7], %s294
        %s296 = sand.u32 %s147, 1
        %s297 = smul.addr %s296, 2
        %s298 = scalar_lea.vmem [#allocation6], %s297
        %p299 = pneg %p186
        %p300 = pneg %p183
        %p301 = scmp.lt.s32.totalorder %s31, 1
        %s302 = scalar_select %p301, %s31, 1
        %s303 = smul.addr %s302, 8
        %s304 = scalar_lea.vmem %s5, %s303
        %p305 = pneg %p212
        %p306 = pneg %p209
        %p307 = scmp.lt.s32.totalorder %s31, 1
        %s308 = scalar_select %p307, %s31, 1
        %s309 = smul.addr %s308, 8
        %s310 = scalar_lea.vmem %s6, %s309
        %s311 = smul.u32 2, %s32
        %s312 = smul.u32 2, %s32
        %s313 = smul.u32 2, %s32
        %p314 = scmp.lt.s32.totalorder %s31, 1
        %s315 = scalar_select %p314, %s31, 1
        %s316 = smul.addr %s315, 8
        %s317 = scalar_lea.vmem %s5, %s316
        %p318 = scmp.lt.s32.totalorder %s31, 1
        %s319 = scalar_select %p318, %s31, 1
        %s320 = smul.addr %s319, 8
        %s321 = scalar_lea.vmem %s6, %s320
        %v323 = vld [vmem:[%s269] sm:$0xff]
        %v324 = vld [vmem:[%s269 + $0x8] sm:$0xff]
        %v325 = vld [vmem:[%s1] sm:$0xf]
        %v326 = vpack.c.bf16 %v323, %v323
        %v327 = vpack.c.bf16 %v324, %v324
        %v328 = vld [vmem:[%s2] sm:$0xff]
        %330 = vset.pattern.permute.xlu0 0
        %331 = vperm.xlu0 %330, %v328
        %v332 = vpop.permute.xlu0 %331
        %vm334 = vcmask 64512
        %v336 = vsel %vm334, %v325, 0
        %vm338 = vcmask 1043456
        %v340 = vsel %vm338, %v326, 0
        %v343 = vsel %vm338, %v327, 0
        %345 = vmatprep.subr.bf16.mxu0 %v343
        %346 = vmatpush1.bf16.msra.mxu0 %v340
        %347 = vmatprep.subr.bf16.mxu0 0
        %348 = vmatpush1.bf16.msra.mxu0 0
        %349 = vmatprep.subr.bf16.mxu0 0
        %350 = vmatpush1.bf16.msra.mxu0 0
        %351 = vmatprep.subr.bf16.mxu0 0
        %352 = vmatpush1.bf16.msra.mxu0 0
        %353 = vmatprep.subr.bf16.mxu0 0
        %354 = vmatpush1.bf16.msra.mxu0 0
        %355 = vmatprep.subr.bf16.mxu0 0
        %356 = vmatpush1.bf16.msra.mxu0 0
        %357 = vmatprep.subr.bf16.mxu0 0
        %358 = vmatpush1.bf16.msra.mxu0 0
        %359 = vmatprep.subr.bf16.mxu0 0
        %360 = vmatpush1.bf16.msra.mxu0 0
        %361 = vmatprep.subr.bf16.mxu0 0
        %362 = vmatpush1.bf16.msra.mxu0 0
        %363 = vmatprep.subr.bf16.mxu0 0
        %364 = vmatpush1.bf16.msra.mxu0 0
        %365 = vmatprep.subr.bf16.mxu0 0
        %366 = vmatpush1.bf16.msra.mxu0 0
        %367 = vmatprep.subr.bf16.mxu0 0
        %368 = vmatpush1.bf16.msra.mxu0 0
        %369 = vmatprep.subr.bf16.mxu0 0
        %370 = vmatpush1.bf16.msra.mxu0 0
        %371 = vmatprep.subr.bf16.mxu0 0
        %372 = vmatpush1.bf16.msra.mxu0 0
        %373 = vmatprep.subr.bf16.mxu0 0
        %374 = vmatpush1.bf16.msra.mxu0 0
        %375 = vmatprep.subr.bf16.mxu0 0
        %376 = vmatpush1.bf16.msra.mxu0 0
        %377 = vmatprep.mubr.bf16.mxu0 0
        %378 = vmatmul.mubr.bf16.gmra.mrb[0].mxu0 %v336
        %v379 = vpop.f32.mrb[0].mxu0
        %v380 = vadd.f32 %v332, %v379
        %v381 = vpop.f32.mrb[0].mxu0
        %v382 = vadd.f32 %v332, %v381
        %v383 = vpop.f32.mrb[0].mxu0
        %v384 = vpop.f32.mrb[0].mxu0
        %385 = vdwg.mxu0
        %v386 = vmax.f32 %v380, 0.0
        %v387 = vmax.f32 %v382, 0.0
        %v388 = vpack.c.bf16 %v386, %v386
        %v389 = vpack.c.bf16 %v387, %v387
        %v392 = vunpack.c.l.b16 %v388
        %v393 = vunpack.c.l.b16 %v389
        %v394 = vpack.c.b16 %v393, %v392
        %396 = vst [vmem:[%s291] sm:$0xff] %v394
        %v397 = vrot.slane %v386, 4
        %v398 = vadd.f32 %v386, %v397
        %v399 = vrot.slane %v398, 2
        %v400 = vadd.f32 %v398, %v399
        %v401 = vrot.slane %v400, 1
        %v402 = vadd.f32 %v400, %v401
        %v403 = vrot.slane %v387, 4
        %v404 = vadd.f32 %v387, %v403
        %v405 = vrot.slane %v404, 2
        %v406 = vadd.f32 %v404, %v405
        %v407 = vrot.slane %v406, 1
        %v408 = vadd.f32 %v406, %v407
        %v411 = vcombine.low %v402, %v408
        %v413 = vunpack.c.l.s4 1966171168
        %v414 = vunpack.c.0.s8 %v413
        %v415 = vlaneseq
        %v416 = vshrl.u32 %v415, 7
        %v417 = vsub.s32 %v414, %v416
        %v418 = vrot.slane %v411, %v417
        %v420 = vunpack.c.l.s4 1966171168
        %v421 = vunpack.c.0.s8 %v420
        %v422 = vlaneseq
        %v423 = vshrl.u32 %v422, 7
        %v424 = vsub.s32 %v421, %v423
        %v425 = vrot.slane %v418, %v424
        %v427 = vlaneseq
        %vm428 = vcmp.ge.s32.totalorder %v427, 0
        %vm429 = vcmp.lt.s32.totalorder %v427, 256
        %vm430 = vmand %vm428, %vm429
        %431 = vst.msk [vmem:[%s298] sm:$0x3] %vm430, %v425
        %p432 = scmp.eq.s32.totalorder %s32, 0
        // Predicated region
        $region37: #{tpu_custom_call.1} parent=31 // pred_check
          %p433 = pneg %p432
        $region38: #{tpu_custom_call.1} parent=31 // pred_check_branch
          %435 = sbr.rel (%p433) target = $region40
        $region39: #{tpu_custom_call.1} parent=31 // pred_region
          %vm436 = vcmask 7168
          %437 = vst.msk [vmem:[%s317] sm:$0xff] %vm436, 0.0
          %438 = vst.msk [vmem:[%s321] sm:$0xff] %vm436, -inf
        $region40: #{tpu_custom_call.1} parent=31 // pred_fallthru
          _
        %v439 = vld [vmem:[%s317] sm:$0xff]
        %v440 = vadd.f32 %v323, %v324
        %441 = vadd.xlane.f32.xlu0 %v440
        %v442 = vpop.xlane.xlu0 %441
        %v443 = vadd.f32 %v439, %v442
        %vm444 = vcmask 7168
        %445 = vst.msk [vmem:[%s317] sm:$0xff] %vm444, %v443
        %v446 = vld [vmem:[%s321] sm:$0xff]
        %v447 = vmax.f32 %v323, %v324
        %448 = vmax.xlane.f32.xlu0 %v447
        %v449 = vpop.xlane.xlu0 %448
        %v450 = vmax.f32 %v446, %v449
        %451 = vst.msk [vmem:[%s321] sm:$0xff] %vm444, %v450
        %s452 = sand.u32 %s119, 1
        %s453 = scalar_lea.sflag [#allocation4], %s452
        %s454 = sand.u32 %s119, 1
        %s455 = smul.addr %s454, 8
        %s456 = scalar_lea.vmem [#allocation5], %s455
        %s457 = sand.u32 %s147, 1
        %s458 = scalar_lea.sflag [#allocation7], %s457
        %s459 = sand.u32 %s147, 1
        %s460 = smul.addr %s459, 2
        %s461 = scalar_lea.vmem [#allocation6], %s460
        %p462 = scmp.lt.s32.totalorder %s31, 1
        %s463 = scalar_select %p462, %s31, 1
        %s464 = smul.addr %s463, 8
        %s465 = scalar_lea.vmem %s5, %s464
        %p466 = scmp.lt.s32.totalorder %s31, 1
        %s467 = scalar_select %p466, %s31, 1
        %s468 = smul.addr %s467, 8
        %s469 = scalar_lea.vmem %s6, %s468
        // Predicated region
        $region41: #{tpu_custom_call.1} parent=31 // pred_check
          %p470 = pneg %p129
        $region42: #{tpu_custom_call.1} parent=31 // pred_check_branch
          %472 = sbr.rel (%p470) target = $region44
        $region43: #{tpu_custom_call.1} parent=31 // pred_region
          %s473 = smul.u32 2, %s32
          %s475 = ssub.s32 128, 128
          %476 = vsyncadd %s453, %s475
          %s477 = smul.addr %s31, 2
          %s478 = sadd.s32 %s473, %s477
          %s479 = smul.addr %s478, 64
          %s480 = scalar_lea.hbm %s3, %s479
          %s482 = sshll.u32 %s456, 4
          %s483 = int_to_ptr.vmem [resolvable:$true] %s482
          %485 = dma.vmem_to_hbm [thread:$0]  %s483, 128, %s480, %s453
        $region44: #{tpu_custom_call.1} parent=31 // pred_fallthru
          _
        // Predicated region
        $region45: #{tpu_custom_call.1} parent=31 // pred_check
          %p486 = pneg %p157
        $region46: #{tpu_custom_call.1} parent=31 // pred_check_branch
          %488 = sbr.rel (%p486) target = $region48
        $region47: #{tpu_custom_call.1} parent=31 // pred_region
          %s489 = smul.u32 2, %s32
          %s491 = ssub.s32 32, 32
          %492 = vsyncadd %s458, %s491
          %s493 = smul.addr %s31, 2
          %s494 = sadd.s32 %s489, %s493
          %s495 = smul.addr %s494, 16
          %s496 = scalar_lea.hbm %s4, %s495
          %s498 = sshll.u32 %s461, 4
          %s499 = int_to_ptr.vmem [resolvable:$true] %s498
          %501 = dma.vmem_to_hbm [thread:$0]  %s499, 32, %s496, %s458
        $region48: #{tpu_custom_call.1} parent=31 // pred_fallthru
          _
        // Predicated region
        $region49: #{tpu_custom_call.1} parent=31 // pred_check
          %p502 = pneg %p183
        $region50: #{tpu_custom_call.1} parent=31 // pred_check_branch
          %504 = sbr.rel (%p502) target = $region52
        $region51: #{tpu_custom_call.1} parent=31 // pred_region
          _
        $region52: #{tpu_custom_call.1} parent=31 // pred_fallthru
          _
        // Predicated region
        $region53: #{tpu_custom_call.1} parent=31 // pred_check
          %p505 = pneg %p209
        $region54: #{tpu_custom_call.1} parent=31 // pred_check_branch
          %507 = sbr.rel (%p505) target = $region56
        $region55: #{tpu_custom_call.1} parent=31 // pred_region
          _
        $region56: #{tpu_custom_call.1} parent=31 // pred_fallthru
          _
      $region32: #{tpu_custom_call.1} parent=5 // pred_fallthru
        _
      %p508 = scmp.le.s32.totalorder 2, %s22
      // Predicated region
      $region57: #{tpu_custom_call.1} parent=5 // pred_check
        %p509 = pneg %p508
      $region58: #{tpu_custom_call.1} parent=5 // pred_check_branch
        %511 = sbr.rel (%p509) target = $region60
      $region59: #{tpu_custom_call.1} parent=5 // pred_region
        %s512 = ssub.s32 %s22, 2
        // Predicated region
        $region61: #{tpu_custom_call.1} parent=59 // pred_check
          %p513 = pneg %p135
        $region62: #{tpu_custom_call.1} parent=59 // pred_check_branch
          %515 = sbr.rel (%p513) target = $region64
        $region63: #{tpu_custom_call.1} parent=59 // pred_region
          %s516 = sand.u32 %s120, 1
          %s517 = scalar_lea.sflag [#allocation4], %s516
          %s518 = sand.u32 %s120, 1
          %s519 = smul.addr %s518, 8
          %s520 = scalar_lea.vmem [#allocation5], %s519
          %521 = dma.done %s517, 128
        $region64: #{tpu_custom_call.1} parent=59 // pred_fallthru
          _
        // Predicated region
        $region65: #{tpu_custom_call.1} parent=59 // pred_check
          %p522 = pneg %p163
        $region66: #{tpu_custom_call.1} parent=59 // pred_check_branch
          %524 = sbr.rel (%p522) target = $region68
        $region67: #{tpu_custom_call.1} parent=59 // pred_region
          %s525 = sand.u32 %s148, 1
          %s526 = scalar_lea.sflag [#allocation7], %s525
          %s527 = sand.u32 %s148, 1
          %s528 = smul.addr %s527, 2
          %s529 = scalar_lea.vmem [#allocation6], %s528
          %530 = dma.done %s526, 32
        $region68: #{tpu_custom_call.1} parent=59 // pred_fallthru
          _
        // Predicated region
        $region69: #{tpu_custom_call.1} parent=59 // pred_check
          %p531 = pneg %p189
        $region70: #{tpu_custom_call.1} parent=59 // pred_check_branch
          %533 = sbr.rel (%p531) target = $region72
        $region71: #{tpu_custom_call.1} parent=59 // pred_region
          %p534 = scmp.lt.s32.totalorder %s33, 1
          %s535 = scalar_select %p534, %s33, 1
          %s536 = smul.addr %s535, 8
          %s537 = scalar_lea.vmem %s5, %s536
        $region72: #{tpu_custom_call.1} parent=59 // pred_fallthru
          _
        // Predicated region
        $region73: #{tpu_custom_call.1} parent=59 // pred_check
          %p538 = pneg %p215
        $region74: #{tpu_custom_call.1} parent=59 // pred_check_branch
          %540 = sbr.rel (%p538) target = $region76
        $region75: #{tpu_custom_call.1} parent=59 // pred_region
          %p541 = scmp.lt.s32.totalorder %s33, 1
          %s542 = scalar_select %p541, %s33, 1
          %s543 = smul.addr %s542, 8
          %s544 = scalar_lea.vmem %s6, %s543
        $region76: #{tpu_custom_call.1} parent=59 // pred_fallthru
          _
      $region60: #{tpu_custom_call.1} parent=5 // pred_fallthru
        _
    $region6: #{tpu_custom_call.1} parent=1 // loop_footer
      %s26 = sadd.s32 1, %s22
    $region7: #{tpu_custom_call.1} parent=1 // loop_footer_branch
      %21 = sbr.rel target = $region3
    $region8: #{tpu_custom_call.1} parent=1 // loop_exit
      _
    %545 = vsyncpa [#allocation3], 1
    %s546 = scalar_lea.sflag [#allocation3], 1
    %547 = vsyncpa %s546, 1
    %548 = vsyncpa [#allocation4], 1
    %s549 = scalar_lea.sflag [#allocation4], 1
    %550 = vsyncpa %s549, 1
    %551 = vsyncpa [#allocation7], 1
    %s552 = scalar_lea.sflag [#allocation7], 1
    %553 = vsyncpa %s552, 1

</llo_original>
